<compile_context>
chip_gen: v7x
topology: tpu7x:2x2x1
jax: 0.10.0
libtpu: 0.0.40
codegen_flags: <defaults>
</compile_context>

<pallas_src>
import math

import jax
import jax.numpy as jnp
from jax.experimental import pallas as pl
from jax.experimental.pallas import tpu as pltpu


def _merge_kernel(x1_ref, x2_ref, w1a_ref, w1b_ref, b1_ref, w2_ref, b2_ref, o_ref):
    # x1_ref: (tb, d1)   x2_ref: (tb, d2)
    # w1a_ref: (d1, d3)  w1b_ref: (d2, d3)  b1_ref: (1, d3)
    # w2_ref:  (d3, d4)  b2_ref: (1, d4)
    # o_ref:   (tb, d4)
    h = jnp.dot(x1_ref[...], w1a_ref[...], preferred_element_type=jnp.float32)
    h = h + jnp.dot(x2_ref[...], w1b_ref[...], preferred_element_type=jnp.float32)
    h = jnp.maximum(h + b1_ref[...], 0.0)
    y = jnp.dot(h.astype(w2_ref.dtype), w2_ref[...],
                preferred_element_type=jnp.float32) + b2_ref[...]
    o_ref[...] = y.astype(o_ref.dtype)


def prepare_merge_params(w1, b1, w2, b2, dim1):
    """One-time parameter prep (do this at load time, NOT per forward call).

    w1: (dim3, dim1+dim2), b1: (dim3,)  -- PyTorch nn.Linear layout
    w2: (dim4, dim3),      b2: (dim4,)
    """
    d3 = w1.shape[0]
    d4 = w2.shape[0]
    assert w2.shape == (d4, d3)
    assert b1.shape == (d3,) and b2.shape == (d4,)
    return {
        "w1a": jnp.transpose(w1[:, :dim1]),   # (d1, d3)
        "w1b": jnp.transpose(w1[:, dim1:]),   # (d2, d3)
        "b1r": b1.reshape(1, d3),             # (1, d3)
        "w2t": jnp.transpose(w2),             # (d3, d4)
        "b2r": b2.reshape(1, d4),             # (1, d4)
    }


def _choose_tile_b(B, d1, d2, d3, d4, x_bytes, vmem_budget_bytes, max_tile=4096):
    """Pick the batch tile from a VMEM budget (resident weights + 2x-buffered I/O)."""
    const_bytes = (d1 * d3 + d2 * d3 + d3 + d3 * d4 + d4) * 4
    # Per-row cost: double-buffered x1/x2/out blocks + f32 intermediates (h, y).
    per_row = 2 * (d1 + d2 + d4) * x_bytes + (d3 + d4) * 4
    avail = max(vmem_budget_bytes - const_bytes, 8 * per_row)
    tb = (avail // per_row) // 8 * 8
    tb = int(max(8, min(tb, max_tile)))
    # Never larger than the (sublane-rounded) batch.
    b_ceil = B if B < 8 else pl.cdiv(B, 8) * 8
    tb = min(tb, b_ceil)
    # v7x megacore: keep >= 2 grid steps when the batch is big enough so the
    # "parallel" axis shards across both TensorCores (one extra ~0.35us step is
    # negligible on 1-TC chips).
    if B >= 512:
        half = pl.cdiv(pl.cdiv(B, 2), 8) * 8
        tb = min(tb, half)
    return tb


def merge_layer_apply(params, x1, x2, *, vmem_budget_bytes=24 << 20):
    """Fused MergeLayer forward on prepared params.  Returns (B, dim4)."""
    B, d1 = x1.shape
    B2, d2 = x2.shape
    assert B == B2, "x1/x2 batch mismatch"
    w1a, w1b, b1r, w2t, b2r = (params["w1a"], params["w1b"], params["b1r"],
                               params["w2t"], params["b2r"])
    d3 = w1a.shape[1]
    d4 = w2t.shape[1]
    assert w1a.shape == (d1, d3) and w1b.shape == (d2, d3)

    x_bytes = x1.dtype.itemsize
    tb = _choose_tile_b(B, d1, d2, d3, d4, x_bytes, vmem_budget_bytes)
    grid = (pl.cdiv(B, tb),)

    # Explicit VMEM budget (v7x: 64 MiB physical, 32 MiB scoped default).
    const_bytes = (d1 * d3 + d2 * d3 + d3 + d3 * d4 + d4) * 4
    est = const_bytes + 2 * tb * (d1 + d2 + d4) * x_bytes + tb * (d3 + d4) * 4
    vmem_limit = int(min(56 << 20, max(2 * est, 16 << 20)))

    out = pl.pallas_call(
        _merge_kernel,
        out_shape=jax.ShapeDtypeStruct((B, d4), x1.dtype),
        grid_spec=pltpu.PrefetchScalarGridSpec(
            num_scalar_prefetch=0,
            grid=grid,
            in_specs=[
                pl.BlockSpec((tb, d1), lambda i: (i, 0)),
                pl.BlockSpec((tb, d2), lambda i: (i, 0)),
                pl.BlockSpec((d1, d3), lambda i: (0, 0)),  # resident across steps
                pl.BlockSpec((d2, d3), lambda i: (0, 0)),
                pl.BlockSpec((1, d3), lambda i: (0, 0)),
                pl.BlockSpec((d3, d4), lambda i: (0, 0)),
                pl.BlockSpec((1, d4), lambda i: (0, 0)),
            ],
            out_specs=pl.BlockSpec((tb, d4), lambda i: (i, 0)),
        ),
        compiler_params=pltpu.CompilerParams(
            dimension_semantics=("parallel",),
            vmem_limit_bytes=vmem_limit,
        ),
    )(x1, x2, w1a, w1b, b1r, w2t, b2r)
    return out


def merge_layer(x1, x2, w1, b1, w2, b2):
    """Convenience one-shot path (preps params then applies)."""
    params = prepare_merge_params(w1, b1, w2, b2, x1.shape[1])
    return merge_layer_apply(params, x1, x2)


if __name__ == "__main__":
    # Small shapes consistent with the module: batch=8, dim1=dim2=16, dim3=32, dim4=8.
    B, dim1, dim2, dim3, dim4 = 8, 16, 16, 32, 8

    key = jax.random.PRNGKey(0)
    k1, k2, k3, k4, k5, k6 = jax.random.split(key, 6)

    x1 = jax.random.normal(k1, (B, dim1), jnp.float32)
    x2 = jax.random.normal(k2, (B, dim2), jnp.float32)

    # Xavier-normal-style weights (matches the module's init), deterministic via PRNGKey(0).
    std1 = math.sqrt(2.0 / (dim1 + dim2 + dim3))
    std2 = math.sqrt(2.0 / (dim3 + dim4))
    w1 = std1 * jax.random.normal(k3, (dim3, dim1 + dim2), jnp.float32)
    b1 = 0.01 * jax.random.normal(k4, (dim3,), jnp.float32)
    w2 = std2 * jax.random.normal(k5, (dim4, dim3), jnp.float32)
    b2 = 0.01 * jax.random.normal(k6, (dim4,), jnp.float32)

    # One-time param prep (hoisted out of the per-call path), then the fused kernel.
    params = prepare_merge_params(w1, b1, w2, b2, dim1)
    out = jax.block_until_ready(merge_layer_apply(params, x1, x2))

    # Pure-JAX reference (same semantics as the PyTorch forward).
    x = jnp.concatenate([x1, x2], axis=1)
    h = jnp.maximum(x @ w1.T + b1, 0.0)
    ref = h @ w2.T + b2

    assert out.shape == (B, dim4)
    assert out.dtype == jnp.float32
    assert jnp.allclose(out, ref, atol=1e-5, rtol=1e-5)

    print("KERNEL_OK")
</pallas_src>

<mosaic_0001>
module attributes {stable_mosaic.version = 11 : i64} {
  func.func @_merge_kernel(%arg0: i32, %arg1: memref<8x16xf32, #tpu.memory_space<vmem>>, %arg2: memref<8x16xf32, #tpu.memory_space<vmem>>, %arg3: memref<16x32xf32, #tpu.memory_space<vmem>>, %arg4: memref<16x32xf32, #tpu.memory_space<vmem>>, %arg5: memref<1x32xf32, #tpu.memory_space<vmem>>, %arg6: memref<32x8xf32, #tpu.memory_space<vmem>>, %arg7: memref<1x8xf32, #tpu.memory_space<vmem>>, %arg8: memref<8x8xf32, #tpu.memory_space<vmem>>) attributes {dimension_semantics = [#tpu.dimension_semantics<parallel>], iteration_bounds = array<i64: 1>, scalar_prefetch = 0 : i64, scratch_operands = 0 : i64, tpu.core_type = #tpu.core_type<tc>, window_params = [{transform_indices = @transform_0, window_bounds = array<i64: 8, 16>}, {transform_indices = @transform_1, window_bounds = array<i64: 8, 16>}, {pipeline_mode = #tpu.pipeline_mode<synchronous>, transform_indices = @transform_2, window_bounds = array<i64: 16, 32>}, {pipeline_mode = #tpu.pipeline_mode<synchronous>, transform_indices = @transform_3, window_bounds = array<i64: 16, 32>}, {pipeline_mode = #tpu.pipeline_mode<synchronous>, transform_indices = @transform_4, window_bounds = array<i64: 1, 32>}, {pipeline_mode = #tpu.pipeline_mode<synchronous>, transform_indices = @transform_5, window_bounds = array<i64: 32, 8>}, {pipeline_mode = #tpu.pipeline_mode<synchronous>, transform_indices = @transform_6, window_bounds = array<i64: 1, 8>}, {transform_indices = @transform_7, window_bounds = array<i64: 8, 8>}]} {
    %c0 = arith.constant 0 : index
    %c0_0 = arith.constant 0 : index
    %0 = vector.load %arg1[%c0, %c0_0] : memref<8x16xf32, #tpu.memory_space<vmem>>, vector<8x16xf32>
    %c0_1 = arith.constant 0 : index
    %c0_2 = arith.constant 0 : index
    %1 = vector.load %arg3[%c0_1, %c0_2] : memref<16x32xf32, #tpu.memory_space<vmem>>, vector<16x32xf32>
    %cst = arith.constant dense<0.000000e+00> : vector<8x32xf32>
    %2 = tpu.matmul %0, %1, %cst {dimension_numbers = #tpu.dot_dimension_numbers<[1], [0], [0], [1], [0, 0, 1, 1], [], []>} : vector<8x16xf32>, vector<16x32xf32>, vector<8x32xf32> -> vector<8x32xf32>
    %c0_3 = arith.constant 0 : index
    %c0_4 = arith.constant 0 : index
    %3 = vector.load %arg2[%c0_3, %c0_4] : memref<8x16xf32, #tpu.memory_space<vmem>>, vector<8x16xf32>
    %c0_5 = arith.constant 0 : index
    %c0_6 = arith.constant 0 : index
    %4 = vector.load %arg4[%c0_5, %c0_6] : memref<16x32xf32, #tpu.memory_space<vmem>>, vector<16x32xf32>
    %cst_7 = arith.constant dense<0.000000e+00> : vector<8x32xf32>
    %5 = tpu.matmul %3, %4, %cst_7 {dimension_numbers = #tpu.dot_dimension_numbers<[1], [0], [0], [1], [0, 0, 1, 1], [], []>} : vector<8x16xf32>, vector<16x32xf32>, vector<8x32xf32> -> vector<8x32xf32>
    %6 = arith.addf %2, %5 : vector<8x32xf32>
    %c0_8 = arith.constant 0 : index
    %c0_9 = arith.constant 0 : index
    %7 = vector.load %arg5[%c0_8, %c0_9] : memref<1x32xf32, #tpu.memory_space<vmem>>, vector<1x32xf32>
    %8 = vector.broadcast %7 : vector<1x32xf32> to vector<8x32xf32>
    %9 = arith.addf %6, %8 : vector<8x32xf32>
    %cst_10 = arith.constant 0.000000e+00 : f32
    %10 = vector.broadcast %cst_10 : f32 to vector<8x32xf32>
    %11 = arith.maximumf %9, %10 : vector<8x32xf32>
    %c0_11 = arith.constant 0 : index
    %c0_12 = arith.constant 0 : index
    %12 = vector.load %arg6[%c0_11, %c0_12] : memref<32x8xf32, #tpu.memory_space<vmem>>, vector<32x8xf32>
    %cst_13 = arith.constant dense<0.000000e+00> : vector<8x8xf32>
    %13 = tpu.matmul %11, %12, %cst_13 {dimension_numbers = #tpu.dot_dimension_numbers<[1], [0], [0], [1], [0, 0, 1, 1], [], []>} : vector<8x32xf32>, vector<32x8xf32>, vector<8x8xf32> -> vector<8x8xf32>
    %c0_14 = arith.constant 0 : index
    %c0_15 = arith.constant 0 : index
    %14 = vector.load %arg7[%c0_14, %c0_15] : memref<1x8xf32, #tpu.memory_space<vmem>>, vector<1x8xf32>
    %15 = vector.broadcast %14 : vector<1x8xf32> to vector<8x8xf32>
    %16 = arith.addf %13, %15 : vector<8x8xf32>
    %c0_16 = arith.constant 0 : index
    %c0_17 = arith.constant 0 : index
    %17 = vector.load %arg8[%c0_16, %c0_17] : memref<8x8xf32, #tpu.memory_space<vmem>>, vector<8x8xf32>
    tpu.vector_store %arg8[%c0_16, %c0_17], %16 {strides = array<i32>} : memref<8x8xf32, #tpu.memory_space<vmem>>, vector<8x8xf32>,
    return
  }
  func.func @transform_0(%arg0: i32) -> (i32, i32) {
    %c0_i32 = arith.constant 0 : i32
    %c0_i32_0 = arith.constant 0 : i32
    return %arg0, %c0_i32 : i32, i32
  }
  func.func @transform_1(%arg0: i32) -> (i32, i32) {
    %c0_i32 = arith.constant 0 : i32
    %c0_i32_0 = arith.constant 0 : i32
    return %arg0, %c0_i32 : i32, i32
  }
  func.func @transform_2(%arg0: i32) -> (i32, i32) {
    %c0_i32 = arith.constant 0 : i32
    %c0_i32_0 = arith.constant 0 : i32
    %c0_i32_1 = arith.constant 0 : i32
    return %c0_i32, %c0_i32_0 : i32, i32
  }
  func.func @transform_3(%arg0: i32) -> (i32, i32) {
    %c0_i32 = arith.constant 0 : i32
    %c0_i32_0 = arith.constant 0 : i32
    %c0_i32_1 = arith.constant 0 : i32
    return %c0_i32, %c0_i32_0 : i32, i32
  }
  func.func @transform_4(%arg0: i32) -> (i32, i32) {
    %c0_i32 = arith.constant 0 : i32
    %c0_i32_0 = arith.constant 0 : i32
    %c0_i32_1 = arith.constant 0 : i32
    return %c0_i32, %c0_i32_0 : i32, i32
  }
  func.func @transform_5(%arg0: i32) -> (i32, i32) {
    %c0_i32 = arith.constant 0 : i32
    %c0_i32_0 = arith.constant 0 : i32
    %c0_i32_1 = arith.constant 0 : i32
    return %c0_i32, %c0_i32_0 : i32, i32
  }
  func.func @transform_6(%arg0: i32) -> (i32, i32) {
    %c0_i32 = arith.constant 0 : i32
    %c0_i32_0 = arith.constant 0 : i32
    %c0_i32_1 = arith.constant 0 : i32
    return %c0_i32, %c0_i32_0 : i32, i32
  }
  func.func @transform_7(%arg0: i32) -> (i32, i32) {
    %c0_i32 = arith.constant 0 : i32
    %c0_i32_0 = arith.constant 0 : i32
    return %arg0, %c0_i32 : i32, i32
  }
}

</mosaic_0001>

<llo_original>
// kernel: tpu_custom_call.1
$region0: #{tpu_custom_call.1}
  #allocation0 [shape = 'u32[]', space=smem, size = 0x4, offset = 0x4, fixed_abs, tag = 'smem constant byte address 0x4 - core index']
  #allocation1 [shape = 'u32[144,128]{1,0:T(1,128)}', space=vmem, size = 0x12000, scoped, tag = 'internal scratch']
  %s0 = inlined_call_operand.vmem [shape: f32[8,16], index: 0, kind: input, shape index: {}]
  %s1 = inlined_call_operand.hbm [shape: f32[8,16], index: 1, kind: input, shape index: {}]
  %s2 = inlined_call_operand.vmem [shape: f32[16,32], index: 2, kind: input, shape index: {}]
  %s3 = inlined_call_operand.vmem [shape: f32[16,32], index: 3, kind: input, shape index: {}]
  %s4 = inlined_call_operand.vmem [shape: f32[1,32], index: 4, kind: input, shape index: {}]
  %s5 = inlined_call_operand.vmem [shape: f32[32,8], index: 5, kind: input, shape index: {}]
  %s6 = inlined_call_operand.vmem [shape: f32[1,8], index: 6, kind: input, shape index: {}]
  %s7 = inlined_call_operand.hbm [shape: f32[8,8], index: 7, kind: output, shape index: {}]
  %s8 = sld [smem:[#allocation0]]
  $region42: #{tpu_custom_call.1} parent=0
    _
  %s10 = ssub.s32 1, %s8
  %s11 = scalar_select 0, %s10, %s8
  $region1: #{tpu_custom_call.1} parent=0
    #allocation2 [shape = 'u8[4096]{0}', space=vmem, size = 0x1000, scoped, tag = 'input window, operand 1, single buffered']
    #allocation3 [shape = 's32[1]{0}', space=sflag, size = 0x4, scoped, tag = 'scoped memory for tpu_custom_call.1']
    #allocation4 [shape = 's32[1]{0}', space=sflag, size = 0x4, scoped, tag = 'scoped memory for tpu_custom_call.1']
    #allocation5 [shape = 'u8[4096]{0}', space=vmem, size = 0x1000, scoped, tag = 'output window, operand 0, single buffered']
    %12 = vsyncpa [#allocation3], 0
    %13 = vsyncpa [#allocation4], 0
    // Predicated region
    $region2: #{tpu_custom_call.1} parent=1 // pred_check
      _
    $region3: #{tpu_custom_call.1} parent=1 // pred_check_branch
      %15 = sbr.rel (0) target = $region5
    $region4: #{tpu_custom_call.1} parent=1 // pred_region
      _
    $region5: #{tpu_custom_call.1} parent=1 // pred_fallthru
      _
    // Predicated region
    $region6: #{tpu_custom_call.1} parent=1 // pred_check
      _
    $region7: #{tpu_custom_call.1} parent=1 // pred_check_branch
      %17 = sbr.rel (0) target = $region9
    $region8: #{tpu_custom_call.1} parent=1 // pred_region
      %s19 = ssub.s32 128, 128
      %20 = vsyncadd [#allocation3], %s19
      %s22 = sshll.u32 [#allocation2], 4
      %s23 = int_to_ptr.vmem [resolvable:$true] %s22
      %25 = dma.hbm_to_vmem [thread:$0]  %s1, 128, %s23, [#allocation3]
    $region9: #{tpu_custom_call.1} parent=1 // pred_fallthru
      _
    // Predicated region
    $region10: #{tpu_custom_call.1} parent=1 // pred_check
      _
    $region11: #{tpu_custom_call.1} parent=1 // pred_check_branch
      %27 = sbr.rel (0) target = $region13
    $region12: #{tpu_custom_call.1} parent=1 // pred_region
      _
    $region13: #{tpu_custom_call.1} parent=1 // pred_fallthru
      _
    // Predicated region
    $region14: #{tpu_custom_call.1} parent=1 // pred_check
      _
    $region15: #{tpu_custom_call.1} parent=1 // pred_check_branch
      %29 = sbr.rel (0) target = $region17
    $region16: #{tpu_custom_call.1} parent=1 // pred_region
      _
    $region17: #{tpu_custom_call.1} parent=1 // pred_fallthru
      _
    // Predicated region
    $region18: #{tpu_custom_call.1} parent=1 // pred_check
      _
    $region19: #{tpu_custom_call.1} parent=1 // pred_check_branch
      %31 = sbr.rel (0) target = $region21
    $region20: #{tpu_custom_call.1} parent=1 // pred_region
      _
    $region21: #{tpu_custom_call.1} parent=1 // pred_fallthru
      _
    // Predicated region
    $region22: #{tpu_custom_call.1} parent=1 // pred_check
      _
    $region23: #{tpu_custom_call.1} parent=1 // pred_check_branch
      %33 = sbr.rel (0) target = $region25
    $region24: #{tpu_custom_call.1} parent=1 // pred_region
      _
    $region25: #{tpu_custom_call.1} parent=1 // pred_fallthru
      _
    // Predicated region
    $region26: #{tpu_custom_call.1} parent=1 // pred_check
      _
    $region27: #{tpu_custom_call.1} parent=1 // pred_check_branch
      %35 = sbr.rel (0) target = $region29
    $region28: #{tpu_custom_call.1} parent=1 // pred_region
      _
    $region29: #{tpu_custom_call.1} parent=1 // pred_fallthru
      _
    // Predicated region
    $region30: #{tpu_custom_call.1} parent=1 // pred_check
      _
    $region31: #{tpu_custom_call.1} parent=1 // pred_check_branch
      %37 = sbr.rel (0) target = $region33
    $region32: #{tpu_custom_call.1} parent=1 // pred_region
      %38 = dma.done [#allocation3], 128
    $region33: #{tpu_custom_call.1} parent=1 // pred_fallthru
      _
    %v39 = vld [vmem:[%s0] sm:$0xff]
    %v40 = vld [vmem:[%s2] sm:$0xff]
    %v41 = vld [vmem:[%s2 + $0x8] sm:$0xff]
    %v42 = vld [vmem:[#allocation2] sm:$0xff]
    %v43 = vld [vmem:[%s3] sm:$0xff]
    %v44 = vld [vmem:[%s3 + $0x8] sm:$0xff]
    %vm45 = vcmask 130048
    %v47 = vsel %vm45, %v42, 0
    %49 = vmatprep.subr.mxu0 0.0
    %50 = vmatpush1.msra.mxu0 %v43
    %51 = vmatprep.subr.mxu0 0.0
    %52 = vmatpush1.msra.mxu0 %v44
    %53 = vmatprep.subr.mxu0 0.0
    %54 = vmatpush1.msra.mxu0 0.0
    %55 = vmatprep.subr.mxu0 0.0
    %56 = vmatpush1.msra.mxu0 0.0
    %57 = vmatprep.subr.mxu0 0.0
    %58 = vmatpush1.msra.mxu0 0.0
    %59 = vmatprep.subr.mxu0 0.0
    %60 = vmatpush1.msra.mxu0 0.0
    %61 = vmatprep.subr.mxu0 0.0
    %62 = vmatpush1.msra.mxu0 0.0
    %63 = vmatprep.subr.mxu0 0.0
    %64 = vmatpush1.msra.mxu0 0.0
    %65 = vmatprep.subr.mxu0 0.0
    %66 = vmatpush1.msra.mxu0 0.0
    %67 = vmatprep.subr.mxu0 0.0
    %68 = vmatpush1.msra.mxu0 0.0
    %69 = vmatprep.subr.mxu0 0.0
    %70 = vmatpush1.msra.mxu0 0.0
    %71 = vmatprep.subr.mxu0 0.0
    %72 = vmatpush1.msra.mxu0 0.0
    %73 = vmatprep.subr.mxu0 0.0
    %74 = vmatpush1.msra.mxu0 0.0
    %75 = vmatprep.subr.mxu0 0.0
    %76 = vmatpush1.msra.mxu0 0.0
    %77 = vmatprep.subr.mxu0 0.0
    %78 = vmatpush1.msra.mxu0 0.0
    %79 = vmatprep.subr.mxu0 0.0
    %80 = vmatpush1.msra.mxu0 0.0
    %81 = vmatprep.subr.mxu0 0.0
    %82 = vmatpush1.msra.mxu0 0.0
    %83 = vmatprep.subr.mxu0 0.0
    %84 = vmatpush1.msra.mxu0 0.0
    %85 = vmatprep.subr.mxu0 0.0
    %86 = vmatpush1.msra.mxu0 0.0
    %87 = vmatprep.subr.mxu0 0.0
    %88 = vmatpush1.msra.mxu0 0.0
    %89 = vmatprep.subr.mxu0 0.0
    %90 = vmatpush1.msra.mxu0 0.0
    %91 = vmatprep.subr.mxu0 0.0
    %92 = vmatpush1.msra.mxu0 0.0
    %93 = vmatprep.subr.mxu0 0.0
    %94 = vmatpush1.msra.mxu0 0.0
    %95 = vmatprep.subr.mxu0 0.0
    %96 = vmatpush1.msra.mxu0 0.0
    %97 = vmatprep.subr.mxu0 0.0
    %98 = vmatpush1.msra.mxu0 0.0
    %99 = vmatprep.subr.mxu0 0.0
    %100 = vmatpush1.msra.mxu0 0.0
    %101 = vmatprep.subr.mxu0 0.0
    %102 = vmatpush1.msra.mxu0 0.0
    %103 = vmatprep.subr.mxu0 0.0
    %104 = vmatpush1.msra.mxu0 0.0
    %105 = vmatprep.subr.mxu0 0.0
    %106 = vmatpush1.msra.mxu0 0.0
    %107 = vmatprep.subr.mxu0 0.0
    %108 = vmatpush1.msra.mxu0 0.0
    %109 = vmatprep.subr.mxu0 0.0
    %110 = vmatpush1.msra.mxu0 0.0
    %111 = vmatprep.subr.mxu0 0.0
    %112 = vmatpush1.msra.mxu0 0.0
    %113 = vmatprep.mubr.f32.mxu0 0.0
    %114 = vmatmul.mubr.f32.gmra.mrb[0].mxu0 %v47
    %v115 = vpop.f32.mrb[0].mxu0
    %v116 = vadd.f32 0.0, %v115
    %v117 = vpop.f32.mrb[0].mxu0
    %118 = vdwg.mxu0
    %v120 = vsel %vm45, %v39, 0
    %122 = vmatprep.subr.mxu0 0.0
    %123 = vmatpush1.msra.mxu0 %v40
    %124 = vmatprep.subr.mxu0 0.0
    %125 = vmatpush1.msra.mxu0 %v41
    %126 = vmatprep.subr.mxu0 0.0
    %127 = vmatpush1.msra.mxu0 0.0
    %128 = vmatprep.subr.mxu0 0.0
    %129 = vmatpush1.msra.mxu0 0.0
    %130 = vmatprep.subr.mxu0 0.0
    %131 = vmatpush1.msra.mxu0 0.0
    %132 = vmatprep.subr.mxu0 0.0
    %133 = vmatpush1.msra.mxu0 0.0
    %134 = vmatprep.subr.mxu0 0.0
    %135 = vmatpush1.msra.mxu0 0.0
    %136 = vmatprep.subr.mxu0 0.0
    %137 = vmatpush1.msra.mxu0 0.0
    %138 = vmatprep.subr.mxu0 0.0
    %139 = vmatpush1.msra.mxu0 0.0
    %140 = vmatprep.subr.mxu0 0.0
    %141 = vmatpush1.msra.mxu0 0.0
    %142 = vmatprep.subr.mxu0 0.0
    %143 = vmatpush1.msra.mxu0 0.0
    %144 = vmatprep.subr.mxu0 0.0
    %145 = vmatpush1.msra.mxu0 0.0
    %146 = vmatprep.subr.mxu0 0.0
    %147 = vmatpush1.msra.mxu0 0.0
    %148 = vmatprep.subr.mxu0 0.0
    %149 = vmatpush1.msra.mxu0 0.0
    %150 = vmatprep.subr.mxu0 0.0
    %151 = vmatpush1.msra.mxu0 0.0
    %152 = vmatprep.subr.mxu0 0.0
    %153 = vmatpush1.msra.mxu0 0.0
    %154 = vmatprep.subr.mxu0 0.0
    %155 = vmatpush1.msra.mxu0 0.0
    %156 = vmatprep.subr.mxu0 0.0
    %157 = vmatpush1.msra.mxu0 0.0
    %158 = vmatprep.subr.mxu0 0.0
    %159 = vmatpush1.msra.mxu0 0.0
    %160 = vmatprep.subr.mxu0 0.0
    %161 = vmatpush1.msra.mxu0 0.0
    %162 = vmatprep.subr.mxu0 0.0
    %163 = vmatpush1.msra.mxu0 0.0
    %164 = vmatprep.subr.mxu0 0.0
    %165 = vmatpush1.msra.mxu0 0.0
    %166 = vmatprep.subr.mxu0 0.0
    %167 = vmatpush1.msra.mxu0 0.0
    %168 = vmatprep.subr.mxu0 0.0
    %169 = vmatpush1.msra.mxu0 0.0
    %170 = vmatprep.subr.mxu0 0.0
    %171 = vmatpush1.msra.mxu0 0.0
    %172 = vmatprep.subr.mxu0 0.0
    %173 = vmatpush1.msra.mxu0 0.0
    %174 = vmatprep.subr.mxu0 0.0
    %175 = vmatpush1.msra.mxu0 0.0
    %176 = vmatprep.subr.mxu0 0.0
    %177 = vmatpush1.msra.mxu0 0.0
    %178 = vmatprep.subr.mxu0 0.0
    %179 = vmatpush1.msra.mxu0 0.0
    %180 = vmatprep.subr.mxu0 0.0
    %181 = vmatpush1.msra.mxu0 0.0
    %182 = vmatprep.subr.mxu0 0.0
    %183 = vmatpush1.msra.mxu0 0.0
    %184 = vmatprep.subr.mxu0 0.0
    %185 = vmatpush1.msra.mxu0 0.0
    %186 = vmatprep.mubr.f32.mxu0 0.0
    %187 = vmatmul.mubr.f32.gmra.mrb[0].mxu0 %v120
    %v188 = vpop.f32.mrb[0].mxu0
    %v189 = vadd.f32 %v116, %v188
    %v190 = vpop.f32.mrb[0].mxu0
    %191 = vdwg.mxu0
    %v192 = vld [vmem:[%s4] sm:$0x1]
    %v194 = vlaneseq
    %v195 = vshrl.u32 %v194, 7
    %v196 = vsub.s32 0, %v195
    %v197 = vrot.slane %v192, %v196
    %v199 = vadd.f32 %v189, %v197
    %v200 = vmax.f32 %v199, 0.0
    %v201 = vld [vmem:[%s5] sm:$0xff]
    %v202 = vld [vmem:[%s5 + $0x8] sm:$0xff]
    %v203 = vld [vmem:[%s5 + $0x10] sm:$0xff]
    %v204 = vld [vmem:[%s5 + $0x18] sm:$0xff]
    %v205 = vld [vmem:[%s6] sm:$0x1]
    %v207 = vlaneseq
    %v208 = vshrl.u32 %v207, 7
    %v209 = vsub.s32 0, %v208
    %v210 = vrot.slane %v205, %v209
    %vm212 = vcmask 261120
    %v214 = vsel %vm212, %v200, 0
    %216 = vmatprep.subr.mxu0 0.0
    %217 = vmatpush1.msra.mxu0 %v201
    %218 = vmatprep.subr.mxu0 0.0
    %219 = vmatpush1.msra.mxu0 %v202
    %220 = vmatprep.subr.mxu0 0.0
    %221 = vmatpush1.msra.mxu0 %v203
    %222 = vmatprep.subr.mxu0 0.0
    %223 = vmatpush1.msra.mxu0 %v204
    %224 = vmatprep.subr.mxu0 0.0
    %225 = vmatpush1.msra.mxu0 0.0
    %226 = vmatprep.subr.mxu0 0.0
    %227 = vmatpush1.msra.mxu0 0.0
    %228 = vmatprep.subr.mxu0 0.0
    %229 = vmatpush1.msra.mxu0 0.0
    %230 = vmatprep.subr.mxu0 0.0
    %231 = vmatpush1.msra.mxu0 0.0
    %232 = vmatprep.subr.mxu0 0.0
    %233 = vmatpush1.msra.mxu0 0.0
    %234 = vmatprep.subr.mxu0 0.0
    %235 = vmatpush1.msra.mxu0 0.0
    %236 = vmatprep.subr.mxu0 0.0
    %237 = vmatpush1.msra.mxu0 0.0
    %238 = vmatprep.subr.mxu0 0.0
    %239 = vmatpush1.msra.mxu0 0.0
    %240 = vmatprep.subr.mxu0 0.0
    %241 = vmatpush1.msra.mxu0 0.0
    %242 = vmatprep.subr.mxu0 0.0
    %243 = vmatpush1.msra.mxu0 0.0
    %244 = vmatprep.subr.mxu0 0.0
    %245 = vmatpush1.msra.mxu0 0.0
    %246 = vmatprep.subr.mxu0 0.0
    %247 = vmatpush1.msra.mxu0 0.0
    %248 = vmatprep.subr.mxu0 0.0
    %249 = vmatpush1.msra.mxu0 0.0
    %250 = vmatprep.subr.mxu0 0.0
    %251 = vmatpush1.msra.mxu0 0.0
    %252 = vmatprep.subr.mxu0 0.0
    %253 = vmatpush1.msra.mxu0 0.0
    %254 = vmatprep.subr.mxu0 0.0
    %255 = vmatpush1.msra.mxu0 0.0
    %256 = vmatprep.subr.mxu0 0.0
    %257 = vmatpush1.msra.mxu0 0.0
    %258 = vmatprep.subr.mxu0 0.0
    %259 = vmatpush1.msra.mxu0 0.0
    %260 = vmatprep.subr.mxu0 0.0
    %261 = vmatpush1.msra.mxu0 0.0
    %262 = vmatprep.subr.mxu0 0.0
    %263 = vmatpush1.msra.mxu0 0.0
    %264 = vmatprep.subr.mxu0 0.0
    %265 = vmatpush1.msra.mxu0 0.0
    %266 = vmatprep.subr.mxu0 0.0
    %267 = vmatpush1.msra.mxu0 0.0
    %268 = vmatprep.subr.mxu0 0.0
    %269 = vmatpush1.msra.mxu0 0.0
    %270 = vmatprep.subr.mxu0 0.0
    %271 = vmatpush1.msra.mxu0 0.0
    %272 = vmatprep.subr.mxu0 0.0
    %273 = vmatpush1.msra.mxu0 0.0
    %274 = vmatprep.subr.mxu0 0.0
    %275 = vmatpush1.msra.mxu0 0.0
    %276 = vmatprep.subr.mxu0 0.0
    %277 = vmatpush1.msra.mxu0 0.0
    %278 = vmatprep.subr.mxu0 0.0
    %279 = vmatpush1.msra.mxu0 0.0
    %280 = vmatprep.mubr.f32.mxu0 0.0
    %281 = vmatmul.mubr.f32.gmra.mrb[0].mxu0 %v214
    %v282 = vpop.f32.mrb[0].mxu0
    %v283 = vadd.f32 %v210, %v282
    %v284 = vpop.f32.mrb[0].mxu0
    %285 = vdwg.mxu0
    %vm286 = vcmask 64512
    %287 = vst.msk [vmem:[#allocation5] sm:$0xff] %vm286, %v283
    // Predicated region
    $region34: #{tpu_custom_call.1} parent=1 // pred_check
      _
    $region35: #{tpu_custom_call.1} parent=1 // pred_check_branch
      %289 = sbr.rel (0) target = $region37
    $region36: #{tpu_custom_call.1} parent=1 // pred_region
      %s291 = ssub.s32 128, 128
      %292 = vsyncadd [#allocation4], %s291
      %s294 = sshll.u32 [#allocation5], 4
      %s295 = int_to_ptr.vmem [resolvable:$true] %s294
      %297 = dma.vmem_to_hbm [thread:$0]  %s295, 128, %s7, [#allocation4]
    $region37: #{tpu_custom_call.1} parent=1 // pred_fallthru
      _
    // Predicated region
    $region38: #{tpu_custom_call.1} parent=1 // pred_check
      _
    $region39: #{tpu_custom_call.1} parent=1 // pred_check_branch
      %299 = sbr.rel (0) target = $region41
    $region40: #{tpu_custom_call.1} parent=1 // pred_region
      %300 = dma.done [#allocation4], 128
    $region41: #{tpu_custom_call.1} parent=1 // pred_fallthru
      _
    %301 = vsyncpa [#allocation3], 1
    %302 = vsyncpa [#allocation4], 1

</llo_original>
